<compile_context>
chip_gen: v5e
topology: v5e:2x2
jax: 0.10.0
libtpu: 0.0.40
codegen_flags: <defaults>
</compile_context>

<pallas_src>
import jax
import jax.numpy as jnp
from jax import lax
from jax.experimental import pallas as pl
from jax.experimental.pallas import tpu as pltpu

_EPS = 1e-5                          # both InstanceNorm2d and BatchNorm2d default
_VMEM_LIMIT = 48 * 1024 * 1024       # safe on v5e/v6e (128 MiB) and v7x (64 MiB)
_TARGET_BLOCK_BYTES = 4 << 20        # ~4 MiB block; double-buffered in+out << limit


# ---------------------------------------------------------------------------
# Kernels
# ---------------------------------------------------------------------------

def _row_stats_kernel(x_ref, sum_ref, sq_ref):
    """Per-row sum and sum-of-squares over the lane (H*W) axis."""
    x = x_ref[...].astype(jnp.float32)
    sum_ref[...] = jnp.sum(x, axis=1, keepdims=True)
    sq_ref[...] = jnp.sum(x * x, axis=1, keepdims=True)


def _scale_shift_kernel(x_ref, scale_ref, shift_ref, o_ref):
    """out = x * scale_row + shift_row (scale/shift broadcast over lanes)."""
    o_ref[...] = (x_ref[...] * scale_ref[...] + shift_ref[...]).astype(o_ref.dtype)


# ---------------------------------------------------------------------------
# Tiling helpers / pallas_call wrappers
# ---------------------------------------------------------------------------

def _pick_tile_r(R, L, itemsize):
    """Row tile so one block is ~_TARGET_BLOCK_BYTES (multiple-of-8 sublanes)."""
    if R <= 8:
        return R
    rows = _TARGET_BLOCK_BYTES // max(1, L * itemsize)
    rows = max(8, (rows // 8) * 8)
    rows = min(rows, R)
    if rows >= R:
        # keep at least 2 grid steps so v7x's two TensorCores both get work
        rows = min(R, (((R + 1) // 2 + 7) // 8) * 8)
    return rows


def _row_stats(x2):
    R, L = x2.shape
    tile_r = _pick_tile_r(R, L, x2.dtype.itemsize)
    grid = (pl.cdiv(R, tile_r),)
    row_spec = pl.BlockSpec((tile_r, L), lambda i: (i, 0))
    col_spec = pl.BlockSpec((tile_r, 1), lambda i: (i, 0))
    return pl.pallas_call(
        _row_stats_kernel,
        out_shape=(jax.ShapeDtypeStruct((R, 1), jnp.float32),
                   jax.ShapeDtypeStruct((R, 1), jnp.float32)),
        grid_spec=pltpu.PrefetchScalarGridSpec(
            num_scalar_prefetch=0,
            grid=grid,
            in_specs=[row_spec],
            out_specs=(col_spec, col_spec),
        ),
        compiler_params=pltpu.CompilerParams(
            dimension_semantics=("parallel",),
            vmem_limit_bytes=_VMEM_LIMIT),
    )(x2)


def _apply_scale_shift(x2, scale, shift):
    R, L = x2.shape
    tile_r = _pick_tile_r(R, L, x2.dtype.itemsize)
    grid = (pl.cdiv(R, tile_r),)
    row_spec = pl.BlockSpec((tile_r, L), lambda i: (i, 0))
    col_spec = pl.BlockSpec((tile_r, 1), lambda i: (i, 0))
    # Note: input_output_aliases={0: 0} would remove the extra HBM allocation,
    # but x2 must be donatable for it to be a true win, so it is left off here.
    return pl.pallas_call(
        _scale_shift_kernel,
        out_shape=jax.ShapeDtypeStruct((R, L), x2.dtype),
        grid_spec=pltpu.PrefetchScalarGridSpec(
            num_scalar_prefetch=0,
            grid=grid,
            in_specs=[row_spec, col_spec, col_spec],
            out_specs=row_spec,
        ),
        compiler_params=pltpu.CompilerParams(
            dimension_semantics=("parallel",),
            vmem_limit_bytes=_VMEM_LIMIT),
    )(x2, scale, shift)


# ---------------------------------------------------------------------------
# IBN forward
# ---------------------------------------------------------------------------

def ibn_forward(x, in_weight, in_bias, bn_weight, bn_bias, eps=_EPS):
    """Forward of IBN.  x: (N, C, H, W) float32.  Returns same shape/dtype.

    IN  on channels [0:half)   : per-(n, c) stats over H*W, affine.
    BN  on channels [half:C)   : per-channel stats over N*H*W (training-mode
                                 forward, biased variance), affine.
    """
    N, C, H, W = x.shape
    half = C // 2
    half2 = C - half
    R, L = N * C, H * W
    x2 = x.reshape(R, L)

    sums, sqs = _row_stats(x2)
    sums = sums.reshape(N, C)
    sqs = sqs.reshape(N, C)

    # --- InstanceNorm half: per-(n, c) statistics over H*W ------------------
    cnt_in = jnp.float32(L)
    mean_in = sums[:, :half] / cnt_in                        # (N, half)
    var_in = sqs[:, :half] / cnt_in - mean_in * mean_in      # biased variance
    rstd_in = lax.rsqrt(var_in + eps)
    scale_in = in_weight[None, :].astype(jnp.float32) * rstd_in
    shift_in = in_bias[None, :].astype(jnp.float32) - mean_in * scale_in

    # --- BatchNorm half: per-channel statistics over N*H*W ------------------
    cnt_bn = jnp.float32(N * L)
    sum_bn = jnp.sum(sums[:, half:], axis=0)                 # (half2,)
    sq_bn = jnp.sum(sqs[:, half:], axis=0)
    mean_bn = sum_bn / cnt_bn
    var_bn = sq_bn / cnt_bn - mean_bn * mean_bn              # biased variance
    rstd_bn = lax.rsqrt(var_bn + eps)
    scale_bn = bn_weight.astype(jnp.float32) * rstd_bn       # (half2,)
    shift_bn = bn_bias.astype(jnp.float32) - mean_bn * scale_bn
    # TODO(synk): BatchNorm running-stat (momentum) buffer updates are a
    # training side-effect and are not part of the forward output.

    scale = jnp.concatenate(
        [scale_in, jnp.broadcast_to(scale_bn[None, :], (N, half2))], axis=1)
    shift = jnp.concatenate(
        [shift_in, jnp.broadcast_to(shift_bn[None, :], (N, half2))], axis=1)
    scale = scale.reshape(R, 1).astype(x2.dtype)
    shift = shift.reshape(R, 1).astype(x2.dtype)

    out2 = _apply_scale_shift(x2, scale, shift)
    return out2.reshape(N, C, H, W)


# ---------------------------------------------------------------------------
# Pure-JAX reference (mirrors the PyTorch semantics)
# ---------------------------------------------------------------------------

def ibn_reference(x, in_weight, in_bias, bn_weight, bn_bias, eps=_EPS):
    N, C, H, W = x.shape
    half = C // 2
    x1, x2 = x[:, :half], x[:, half:]
    m1 = x1.mean(axis=(2, 3), keepdims=True)
    v1 = x1.var(axis=(2, 3), keepdims=True)
    o1 = ((x1 - m1) / jnp.sqrt(v1 + eps)
          * in_weight.reshape(1, -1, 1, 1) + in_bias.reshape(1, -1, 1, 1))
    m2 = x2.mean(axis=(0, 2, 3), keepdims=True)
    v2 = x2.var(axis=(0, 2, 3), keepdims=True)
    o2 = ((x2 - m2) / jnp.sqrt(v2 + eps)
          * bn_weight.reshape(1, -1, 1, 1) + bn_bias.reshape(1, -1, 1, 1))
    return jnp.concatenate([o1, o2], axis=1)


# ---------------------------------------------------------------------------
# Main
# ---------------------------------------------------------------------------

if __name__ == "__main__":
    key = jax.random.PRNGKey(0)
    N, C, H, W = 2, 4, 16, 16
    half = C // 2
    half2 = C - half
    kx, kw1, kb1, kw2, kb2, kx2 = jax.random.split(key, 6)

    x = jax.random.normal(kx, (N, C, H, W), dtype=jnp.float32)
    # non-trivial affine params (PyTorch defaults would be ones / zeros)
    in_w = 1.0 + 0.1 * jax.random.normal(kw1, (half,), dtype=jnp.float32)
    in_b = 0.1 * jax.random.normal(kb1, (half,), dtype=jnp.float32)
    bn_w = 1.0 + 0.1 * jax.random.normal(kw2, (half2,), dtype=jnp.float32)
    bn_b = 0.1 * jax.random.normal(kb2, (half2,), dtype=jnp.float32)

    out = jax.block_until_ready(ibn_forward(x, in_w, in_b, bn_w, bn_b))
    ref = ibn_reference(x, in_w, in_b, bn_w, bn_b)
    ok = bool(jnp.allclose(out, ref, atol=1e-4, rtol=1e-4))

    # Second shape exercises multi-block tiling (grid > 1, both v7x TCs).
    N2, C2, H2, W2 = 2, 32, 16, 16
    x_big = jax.random.normal(kx2, (N2, C2, H2, W2), dtype=jnp.float32)
    in_w2 = jnp.ones((C2 // 2,), jnp.float32)
    in_b2 = jnp.zeros((C2 // 2,), jnp.float32)
    bn_w2 = jnp.ones((C2 - C2 // 2,), jnp.float32)
    bn_b2 = jnp.zeros((C2 - C2 // 2,), jnp.float32)
    out_big = jax.block_until_ready(
        ibn_forward(x_big, in_w2, in_b2, bn_w2, bn_b2))
    ref_big = ibn_reference(x_big, in_w2, in_b2, bn_w2, bn_b2)
    ok = ok and bool(jnp.allclose(out_big, ref_big, atol=1e-4, rtol=1e-4))

    if ok:
        print("KERNEL_OK")
    else:
        print("MISMATCH")
</pallas_src>

<mosaic_0001>
module attributes {stable_mosaic.version = 11 : i64} {
  func.func @_row_stats_kernel(%arg0: i32, %arg1: memref<8x256xf32, #tpu.memory_space<vmem>>, %arg2: memref<8x1xf32, #tpu.memory_space<vmem>>, %arg3: memref<8x1xf32, #tpu.memory_space<vmem>>) attributes {dimension_semantics = [#tpu.dimension_semantics<parallel>], iteration_bounds = array<i64: 1>, scalar_prefetch = 0 : i64, scratch_operands = 0 : i64, tpu.core_type = #tpu.core_type<tc>, window_params = [{transform_indices = @transform_0, window_bounds = array<i64: 8, 256>}, {transform_indices = @transform_1, window_bounds = array<i64: 8, 1>}, {transform_indices = @transform_2, window_bounds = array<i64: 8, 1>}]} {
    %c0 = arith.constant 0 : index
    %c0_0 = arith.constant 0 : index
    %0 = vector.load %arg1[%c0, %c0_0] : memref<8x256xf32, #tpu.memory_space<vmem>>, vector<8x256xf32>
    %cst = arith.constant dense<0.000000e+00> : vector<8xf32>
    %1 = vector.multi_reduction <add>, %0, %cst [1] : vector<8x256xf32> to vector<8xf32>
    %2 = vector.shape_cast %1 : vector<8xf32> to vector<8x1xf32>
    %c0_1 = arith.constant 0 : index
    %c0_2 = arith.constant 0 : index
    %3 = vector.load %arg2[%c0_1, %c0_2] : memref<8x1xf32, #tpu.memory_space<vmem>>, vector<8x1xf32>
    tpu.vector_store %arg2[%c0_1, %c0_2], %2 {strides = array<i32>} : memref<8x1xf32, #tpu.memory_space<vmem>>, vector<8x1xf32>,
    %4 = arith.mulf %0, %0 : vector<8x256xf32>
    %cst_3 = arith.constant dense<0.000000e+00> : vector<8xf32>
    %5 = vector.multi_reduction <add>, %4, %cst_3 [1] : vector<8x256xf32> to vector<8xf32>
    %6 = vector.shape_cast %5 : vector<8xf32> to vector<8x1xf32>
    %c0_4 = arith.constant 0 : index
    %c0_5 = arith.constant 0 : index
    %7 = vector.load %arg3[%c0_4, %c0_5] : memref<8x1xf32, #tpu.memory_space<vmem>>, vector<8x1xf32>
    tpu.vector_store %arg3[%c0_4, %c0_5], %6 {strides = array<i32>} : memref<8x1xf32, #tpu.memory_space<vmem>>, vector<8x1xf32>,
    return
  }
  func.func @transform_0(%arg0: i32) -> (i32, i32) {
    %c0_i32 = arith.constant 0 : i32
    %c0_i32_0 = arith.constant 0 : i32
    return %arg0, %c0_i32 : i32, i32
  }
  func.func @transform_1(%arg0: i32) -> (i32, i32) {
    %c0_i32 = arith.constant 0 : i32
    %c0_i32_0 = arith.constant 0 : i32
    return %arg0, %c0_i32 : i32, i32
  }
  func.func @transform_2(%arg0: i32) -> (i32, i32) {
    %c0_i32 = arith.constant 0 : i32
    %c0_i32_0 = arith.constant 0 : i32
    return %arg0, %c0_i32 : i32, i32
  }
}

</mosaic_0001>

<llo_original>
// kernel: tpu_custom_call.1
$region0: #{tpu_custom_call.1}
  #allocation0 [shape = 'u32[]', space=smem, size = 0x4, offset = 0x4, fixed_abs, tag = 'smem constant byte address 0x4 - core index']
  #allocation1 [shape = 'u32[72,128]{1,0:T(1,128)}', space=vmem, size = 0x9000, scoped, tag = 'internal scratch']
  %s0 = inlined_call_operand.hbm [shape: f32[8,256], index: 0, kind: input, shape index: {}]
  %s1 = inlined_call_operand.vmem [shape: f32[8,1], index: 1, kind: output, shape index: {0}]
  %s2 = inlined_call_operand.vmem [shape: f32[8,1], index: 2, kind: output, shape index: {1}]
  %3 = xla_tuple %s1, %s2
  %s4 = sld [smem:[#allocation0]]
  $region26: #{tpu_custom_call.1} parent=0
    _
  %s6 = ssub.s32 1, %s4
  %s7 = scalar_select 0, %s6, %s4
  $region1: #{tpu_custom_call.1} parent=0
    #allocation2 [shape = 'u8[8192]{0}', space=vmem, size = 0x2000, scoped, tag = 'input window, operand 0, single buffered']
    #allocation3 [shape = 's32[1]{0}', space=sflag, size = 0x4, scoped, tag = 'scoped memory for tpu_custom_call.1']
    %8 = vsyncpa [#allocation3], 0
    // Predicated region
    $region2: #{tpu_custom_call.1} parent=1 // pred_check
      _
    $region3: #{tpu_custom_call.1} parent=1 // pred_check_branch
      %10 = sbr.rel (0) target = $region5
    $region4: #{tpu_custom_call.1} parent=1 // pred_region
      %12 = vsyncadd [#allocation3], 0
      %s14 = sshll.u32 %s0, 4
      %s15 = int_to_ptr.hbm [resolvable:$true] %s14
      %s16 = sshll.u32 [#allocation2], 4
      %s17 = int_to_ptr.vmem [resolvable:$true] %s16
      %19 = dma.hbm_to_vmem [thread:$0]  %s15, 256, %s17, [#allocation3]
    $region5: #{tpu_custom_call.1} parent=1 // pred_fallthru
      _
    // Predicated region
    $region6: #{tpu_custom_call.1} parent=1 // pred_check
      _
    $region7: #{tpu_custom_call.1} parent=1 // pred_check_branch
      %21 = sbr.rel (0) target = $region9
    $region8: #{tpu_custom_call.1} parent=1 // pred_region
      %23 = dma.done [#allocation3], 256
    $region9: #{tpu_custom_call.1} parent=1 // pred_fallthru
      _
    %v24 = vld [vmem:[#allocation2] sm:$0xff]
    %v25 = vld [vmem:[#allocation2 + $0x8] sm:$0xff]
    %v26 = vadd.f32 %v24, %v25
    %27 = vadd.xlane.f32.xlu0 %v26
    %v28 = vpop.xlane.xlu0 %27
    %vm29 = vcmask 7168
    %30 = vst.msk [vmem:[%s1] sm:$0xff] %vm29, %v28
    %v31 = vmul.f32 %v24, %v24
    %v32 = vmul.f32 %v25, %v25
    %v33 = vadd.f32 %v31, %v32
    %34 = vadd.xlane.f32.xlu0 %v33
    %v35 = vpop.xlane.xlu0 %34
    %36 = vst.msk [vmem:[%s2] sm:$0xff] %vm29, %v35
    // Predicated region
    $region10: #{tpu_custom_call.1} parent=1 // pred_check
      _
    $region11: #{tpu_custom_call.1} parent=1 // pred_check_branch
      %38 = sbr.rel (0) target = $region13
    $region12: #{tpu_custom_call.1} parent=1 // pred_region
      _
    $region13: #{tpu_custom_call.1} parent=1 // pred_fallthru
      _
    // Predicated region
    $region14: #{tpu_custom_call.1} parent=1 // pred_check
      _
    $region15: #{tpu_custom_call.1} parent=1 // pred_check_branch
      %40 = sbr.rel (0) target = $region17
    $region16: #{tpu_custom_call.1} parent=1 // pred_region
      _
    $region17: #{tpu_custom_call.1} parent=1 // pred_fallthru
      _
    // Predicated region
    $region18: #{tpu_custom_call.1} parent=1 // pred_check
      _
    $region19: #{tpu_custom_call.1} parent=1 // pred_check_branch
      %42 = sbr.rel (0) target = $region21
    $region20: #{tpu_custom_call.1} parent=1 // pred_region
      _
    $region21: #{tpu_custom_call.1} parent=1 // pred_fallthru
      _
    // Predicated region
    $region22: #{tpu_custom_call.1} parent=1 // pred_check
      _
    $region23: #{tpu_custom_call.1} parent=1 // pred_check_branch
      %44 = sbr.rel (0) target = $region25
    $region24: #{tpu_custom_call.1} parent=1 // pred_region
      _
    $region25: #{tpu_custom_call.1} parent=1 // pred_fallthru
      _
    %45 = vsyncpa [#allocation3], 1

</llo_original>
